<compile_context>
chip_gen: v7x
topology: tpu7x:2x2x1
jax: 0.10.0
libtpu: 0.0.40
codegen_flags: <defaults>
</compile_context>

<pallas_src>
import functools

import jax
import jax.numpy as jnp
from jax.experimental import pallas as pl
from jax.experimental.pallas import tpu as pltpu

N_PAD = 128          # lane-dense output width (>= out_features, multiple of 128)
BLOCK_M = 512        # batch tile when batch grows beyond a single block


def _linear_kernel(x_ref, w_ref, b_ref, o_ref):
    # x_ref: [tm, K], w_ref: [K, N_PAD], b_ref: [1, N_PAD], o_ref: [tm, N_PAD]
    # Tiny K/N contraction; a single MXU pass. The output store is a
    # full-lane unmasked vst because the last dim is 128.
    o_ref[...] = (
        jnp.dot(x_ref[...], w_ref[...], preferred_element_type=jnp.float32)
        + b_ref[...]
    )


@functools.partial(jax.jit, static_argnames=("out_features",))
def _linear_forward(x, w_kn_pad, b_pad, *, out_features):
    """y = (x @ w_kn_pad + b_pad)[:, :out_features] with lane-dense kernel output."""
    m, k = x.shape
    n_pad = w_kn_pad.shape[1]

    # Single full-array block for small batch; 512-row tiles otherwise.
    tm = m if m <= BLOCK_M else BLOCK_M
    grid_m = pl.cdiv(m, tm)

    y_pad = pl.pallas_call(
        _linear_kernel,
        out_shape=jax.ShapeDtypeStruct((m, n_pad), x.dtype),
        grid=(grid_m,),
        in_specs=[
            pl.BlockSpec((tm, k), lambda i: (i, 0)),        # x tiles over M
            pl.BlockSpec((k, n_pad), lambda i: (0, 0)),     # full weight (resident)
            pl.BlockSpec((1, n_pad), lambda i: (0, 0)),     # full bias (resident)
        ],
        out_specs=pl.BlockSpec((tm, n_pad), lambda i: (i, 0)),
        compiler_params=pltpu.CompilerParams(
            # M axis is independent -> megacore sharding on v7x (2 TCs/chip).
            dimension_semantics=("parallel",),
        ),
    )(x, w_kn_pad, b_pad)

    return y_pad[:, :out_features]


class SimpleModelPallas:
    """Pallas equivalent of SimpleModel: forward(x) = Linear(10, 2)(x).

    Parameters are pre-transposed to [K, N] and zero-padded to N_PAD lanes
    exactly once at construction, so the per-call path has no transpose /
    reshape HBM ops.
    """

    def __init__(self, weight, bias):
        # weight: [out_features, in_features] (PyTorch layout), bias: [out_features]
        self.out_features, self.in_features = weight.shape
        w_kn = weight.T.astype(jnp.float32)                      # [K, N]
        w_pad = jnp.zeros((self.in_features, N_PAD), jnp.float32)
        self.w_pad = w_pad.at[:, : self.out_features].set(w_kn)
        b_pad = jnp.zeros((1, N_PAD), jnp.float32)
        self.b_pad = b_pad.at[:, : self.out_features].set(bias.astype(jnp.float32))

    def __call__(self, x):
        return _linear_forward(
            x, self.w_pad, self.b_pad, out_features=self.out_features
        )


if __name__ == "__main__":
    key = jax.random.PRNGKey(0)
    k_x, k_w, k_b = jax.random.split(key, 3)

    batch, in_features, out_features = 8, 10, 2

    # Deterministic nn.Linear-style init: uniform(-1/sqrt(fan_in), 1/sqrt(fan_in)).
    bound = 1.0 / jnp.sqrt(jnp.float32(in_features))
    x = jax.random.normal(k_x, (batch, in_features), dtype=jnp.float32)
    weight = jax.random.uniform(
        k_w, (out_features, in_features), minval=-bound, maxval=bound,
        dtype=jnp.float32)
    bias = jax.random.uniform(
        k_b, (out_features,), minval=-bound, maxval=bound, dtype=jnp.float32)

    model = SimpleModelPallas(weight, bias)
    y = model(x)
    y = jax.block_until_ready(y)

    # Correctness check against plain-JAX reference of nn.Linear.
    y_ref = x @ weight.T + bias
    assert y.shape == (batch, out_features)
    assert jnp.allclose(y, y_ref, atol=1e-5, rtol=1e-5)

    print("KERNEL_OK")
</pallas_src>

<mosaic_0001>
module attributes {stable_mosaic.version = 11 : i64} {
  func.func @_linear_kernel(%arg0: i32, %arg1: memref<8x10xf32, #tpu.memory_space<vmem>>, %arg2: memref<10x128xf32, #tpu.memory_space<vmem>>, %arg3: memref<1x128xf32, #tpu.memory_space<vmem>>, %arg4: memref<8x128xf32, #tpu.memory_space<vmem>>) attributes {dimension_semantics = [#tpu.dimension_semantics<parallel>], iteration_bounds = array<i64: 1>, scalar_prefetch = 0 : i64, scratch_operands = 0 : i64, tpu.core_type = #tpu.core_type<tc>, window_params = [{transform_indices = @transform_0, window_bounds = array<i64: 8, 10>}, {pipeline_mode = #tpu.pipeline_mode<synchronous>, transform_indices = @transform_1, window_bounds = array<i64: 10, 128>}, {pipeline_mode = #tpu.pipeline_mode<synchronous>, transform_indices = @transform_2, window_bounds = array<i64: 1, 128>}, {transform_indices = @transform_3, window_bounds = array<i64: 8, 128>}]} {
    %c0 = arith.constant 0 : index
    %c0_0 = arith.constant 0 : index
    %0 = vector.load %arg1[%c0, %c0_0] : memref<8x10xf32, #tpu.memory_space<vmem>>, vector<8x10xf32>
    %c0_1 = arith.constant 0 : index
    %c0_2 = arith.constant 0 : index
    %1 = vector.load %arg2[%c0_1, %c0_2] : memref<10x128xf32, #tpu.memory_space<vmem>>, vector<10x128xf32>
    %cst = arith.constant dense<0.000000e+00> : vector<8x128xf32>
    %2 = tpu.matmul %0, %1, %cst {dimension_numbers = #tpu.dot_dimension_numbers<[1], [0], [0], [1], [0, 0, 1, 1], [], []>} : vector<8x10xf32>, vector<10x128xf32>, vector<8x128xf32> -> vector<8x128xf32>
    %c0_3 = arith.constant 0 : index
    %c0_4 = arith.constant 0 : index
    %3 = vector.load %arg3[%c0_3, %c0_4] : memref<1x128xf32, #tpu.memory_space<vmem>>, vector<1x128xf32>
    %4 = vector.broadcast %3 : vector<1x128xf32> to vector<8x128xf32>
    %5 = arith.addf %2, %4 : vector<8x128xf32>
    %c0_5 = arith.constant 0 : index
    %c0_6 = arith.constant 0 : index
    %6 = vector.load %arg4[%c0_5, %c0_6] : memref<8x128xf32, #tpu.memory_space<vmem>>, vector<8x128xf32>
    tpu.vector_store %arg4[%c0_5, %c0_6], %5 {strides = array<i32>} : memref<8x128xf32, #tpu.memory_space<vmem>>, vector<8x128xf32>,
    return
  }
  func.func @transform_0(%arg0: i32) -> (i32, i32) {
    %c0_i32 = arith.constant 0 : i32
    %c0_i32_0 = arith.constant 0 : i32
    return %arg0, %c0_i32 : i32, i32
  }
  func.func @transform_1(%arg0: i32) -> (i32, i32) {
    %c0_i32 = arith.constant 0 : i32
    %c0_i32_0 = arith.constant 0 : i32
    %c0_i32_1 = arith.constant 0 : i32
    return %c0_i32, %c0_i32_0 : i32, i32
  }
  func.func @transform_2(%arg0: i32) -> (i32, i32) {
    %c0_i32 = arith.constant 0 : i32
    %c0_i32_0 = arith.constant 0 : i32
    %c0_i32_1 = arith.constant 0 : i32
    return %c0_i32, %c0_i32_0 : i32, i32
  }
  func.func @transform_3(%arg0: i32) -> (i32, i32) {
    %c0_i32 = arith.constant 0 : i32
    %c0_i32_0 = arith.constant 0 : i32
    return %arg0, %c0_i32 : i32, i32
  }
}

</mosaic_0001>

<llo_original>
// kernel: _linear_forward.1
$region0: #{_linear_forward.1}
  #allocation0 [shape = 'u32[]', space=smem, size = 0x4, offset = 0x4, fixed_abs, tag = 'smem constant byte address 0x4 - core index']
  #allocation1 [shape = 'u32[144,128]{1,0:T(1,128)}', space=vmem, size = 0x12000, scoped, tag = 'internal scratch']
  %s0 = inlined_call_operand.hbm [shape: f32[8,10], index: 0, kind: input, shape index: {}]
  %s1 = inlined_call_operand.hbm [shape: f32[10,128], index: 1, kind: input, shape index: {}]
  %s2 = inlined_call_operand.vmem [shape: f32[1,128], index: 2, kind: input, shape index: {}]
  %s3 = inlined_call_operand.vmem [shape: f32[8,128], index: 3, kind: output, shape index: {}]
  %s4 = sld [smem:[#allocation0]]
  $region30: #{_linear_forward.1} parent=0
    _
  %s6 = ssub.s32 1, %s4
  %s7 = scalar_select 0, %s6, %s4
  $region1: #{_linear_forward.1} parent=0
    #allocation2 [shape = 'u8[4096]{0}', space=vmem, size = 0x1000, scoped, tag = 'input window, operand 0, single buffered']
    #allocation3 [shape = 's32[1]{0}', space=sflag, size = 0x4, scoped, tag = 'scoped memory for _linear_forward.1']
    #allocation4 [shape = 'u8[8192]{0}', space=vmem, size = 0x2000, scoped, tag = 'input window, operand 1, single buffered']
    #allocation5 [shape = 's32[1]{0}', space=sflag, size = 0x4, scoped, tag = 'scoped memory for _linear_forward.1']
    %8 = vsyncpa [#allocation3], 0
    %9 = vsyncpa [#allocation5], 0
    // Predicated region
    $region2: #{_linear_forward.1} parent=1 // pred_check
      _
    $region3: #{_linear_forward.1} parent=1 // pred_check_branch
      %11 = sbr.rel (0) target = $region5
    $region4: #{_linear_forward.1} parent=1 // pred_region
      %s13 = ssub.s32 128, 128
      %14 = vsyncadd [#allocation3], %s13
      %s16 = sshll.u32 [#allocation2], 4
      %s17 = int_to_ptr.vmem [resolvable:$true] %s16
      %19 = dma.hbm_to_vmem [thread:$0]  %s0, 128, %s17, [#allocation3]
    $region5: #{_linear_forward.1} parent=1 // pred_fallthru
      _
    // Predicated region
    $region6: #{_linear_forward.1} parent=1 // pred_check
      _
    $region7: #{_linear_forward.1} parent=1 // pred_check_branch
      %21 = sbr.rel (0) target = $region9
    $region8: #{_linear_forward.1} parent=1 // pred_region
      %s23 = ssub.s32 256, 256
      %24 = vsyncadd [#allocation5], %s23
      %s25 = sshll.u32 [#allocation4], 4
      %s26 = int_to_ptr.vmem [resolvable:$true] %s25
      %31 = dma.hbm_to_vmem [thread:$0]  %s1, 256, %s26, [#allocation5], 128, 128, 8
    $region9: #{_linear_forward.1} parent=1 // pred_fallthru
      _
    // Predicated region
    $region10: #{_linear_forward.1} parent=1 // pred_check
      _
    $region11: #{_linear_forward.1} parent=1 // pred_check_branch
      %33 = sbr.rel (0) target = $region13
    $region12: #{_linear_forward.1} parent=1 // pred_region
      _
    $region13: #{_linear_forward.1} parent=1 // pred_fallthru
      _
    // Predicated region
    $region14: #{_linear_forward.1} parent=1 // pred_check
      _
    $region15: #{_linear_forward.1} parent=1 // pred_check_branch
      %35 = sbr.rel (0) target = $region17
    $region16: #{_linear_forward.1} parent=1 // pred_region
      %36 = dma.done [#allocation3], 128
    $region17: #{_linear_forward.1} parent=1 // pred_fallthru
      _
    // Predicated region
    $region18: #{_linear_forward.1} parent=1 // pred_check
      _
    $region19: #{_linear_forward.1} parent=1 // pred_check_branch
      %38 = sbr.rel (0) target = $region21
    $region20: #{_linear_forward.1} parent=1 // pred_region
      %39 = dma.done [#allocation5], 256
    $region21: #{_linear_forward.1} parent=1 // pred_fallthru
      _
    %v40 = vld [vmem:[#allocation2] sm:$0xff]
    %v41 = vld [vmem:[#allocation4] sm:$0xff]
    %v42 = vld [vmem:[#allocation4 + $0x8] sm:$0x3]
    %v43 = vld [vmem:[%s2] sm:$0x1]
    %v45 = vlaneseq
    %v46 = vshrl.u32 %v45, 7
    %v47 = vsub.s32 0, %v46
    %v48 = vrot.slane %v43, %v47
    %vm50 = vcmask 80896
    %v52 = vsel %vm50, %v40, 0
    %vm54 = vcmask 1041408
    %v56 = vsel %vm54, %v42, 0
    %58 = vmatprep.subr.mxu0 0.0
    %59 = vmatpush1.msra.mxu0 %v41
    %60 = vmatprep.subr.mxu0 0.0
    %61 = vmatpush1.msra.mxu0 %v56
    %62 = vmatprep.subr.mxu0 0.0
    %63 = vmatpush1.msra.mxu0 0.0
    %64 = vmatprep.subr.mxu0 0.0
    %65 = vmatpush1.msra.mxu0 0.0
    %66 = vmatprep.subr.mxu0 0.0
    %67 = vmatpush1.msra.mxu0 0.0
    %68 = vmatprep.subr.mxu0 0.0
    %69 = vmatpush1.msra.mxu0 0.0
    %70 = vmatprep.subr.mxu0 0.0
    %71 = vmatpush1.msra.mxu0 0.0
    %72 = vmatprep.subr.mxu0 0.0
    %73 = vmatpush1.msra.mxu0 0.0
    %74 = vmatprep.subr.mxu0 0.0
    %75 = vmatpush1.msra.mxu0 0.0
    %76 = vmatprep.subr.mxu0 0.0
    %77 = vmatpush1.msra.mxu0 0.0
    %78 = vmatprep.subr.mxu0 0.0
    %79 = vmatpush1.msra.mxu0 0.0
    %80 = vmatprep.subr.mxu0 0.0
    %81 = vmatpush1.msra.mxu0 0.0
    %82 = vmatprep.subr.mxu0 0.0
    %83 = vmatpush1.msra.mxu0 0.0
    %84 = vmatprep.subr.mxu0 0.0
    %85 = vmatpush1.msra.mxu0 0.0
    %86 = vmatprep.subr.mxu0 0.0
    %87 = vmatpush1.msra.mxu0 0.0
    %88 = vmatprep.subr.mxu0 0.0
    %89 = vmatpush1.msra.mxu0 0.0
    %90 = vmatprep.subr.mxu0 0.0
    %91 = vmatpush1.msra.mxu0 0.0
    %92 = vmatprep.subr.mxu0 0.0
    %93 = vmatpush1.msra.mxu0 0.0
    %94 = vmatprep.subr.mxu0 0.0
    %95 = vmatpush1.msra.mxu0 0.0
    %96 = vmatprep.subr.mxu0 0.0
    %97 = vmatpush1.msra.mxu0 0.0
    %98 = vmatprep.subr.mxu0 0.0
    %99 = vmatpush1.msra.mxu0 0.0
    %100 = vmatprep.subr.mxu0 0.0
    %101 = vmatpush1.msra.mxu0 0.0
    %102 = vmatprep.subr.mxu0 0.0
    %103 = vmatpush1.msra.mxu0 0.0
    %104 = vmatprep.subr.mxu0 0.0
    %105 = vmatpush1.msra.mxu0 0.0
    %106 = vmatprep.subr.mxu0 0.0
    %107 = vmatpush1.msra.mxu0 0.0
    %108 = vmatprep.subr.mxu0 0.0
    %109 = vmatpush1.msra.mxu0 0.0
    %110 = vmatprep.subr.mxu0 0.0
    %111 = vmatpush1.msra.mxu0 0.0
    %112 = vmatprep.subr.mxu0 0.0
    %113 = vmatpush1.msra.mxu0 0.0
    %114 = vmatprep.subr.mxu0 0.0
    %115 = vmatpush1.msra.mxu0 0.0
    %116 = vmatprep.subr.mxu0 0.0
    %117 = vmatpush1.msra.mxu0 0.0
    %118 = vmatprep.subr.mxu0 0.0
    %119 = vmatpush1.msra.mxu0 0.0
    %120 = vmatprep.subr.mxu0 0.0
    %121 = vmatpush1.msra.mxu0 0.0
    %122 = vmatprep.mubr.f32.mxu0 0.0
    %123 = vmatmul.mubr.f32.gmra.mrb[0].mxu0 %v52
    %v124 = vpop.f32.mrb[0].mxu0
    %v125 = vadd.f32 %v48, %v124
    %v126 = vpop.f32.mrb[0].mxu0
    %127 = vdwg.mxu0
    %128 = vst [vmem:[%s3] sm:$0xff] %v125
    // Predicated region
    $region22: #{_linear_forward.1} parent=1 // pred_check
      _
    $region23: #{_linear_forward.1} parent=1 // pred_check_branch
      %130 = sbr.rel (0) target = $region25
    $region24: #{_linear_forward.1} parent=1 // pred_region
      _
    $region25: #{_linear_forward.1} parent=1 // pred_fallthru
      _
    // Predicated region
    $region26: #{_linear_forward.1} parent=1 // pred_check
      _
    $region27: #{_linear_forward.1} parent=1 // pred_check_branch
      %132 = sbr.rel (0) target = $region29
    $region28: #{_linear_forward.1} parent=1 // pred_region
      _
    $region29: #{_linear_forward.1} parent=1 // pred_fallthru
      _
    %133 = vsyncpa [#allocation3], 1
    %134 = vsyncpa [#allocation5], 1

</llo_original>
